<compile_context>
chip_gen: v6e
topology: v6e:2x2x1
jax: 0.10.0
libtpu: 0.0.40
codegen_flags: <defaults>
</compile_context>

<pallas_src>
import jax
import jax.numpy as jnp
from jax.experimental import pallas as pl
from jax.experimental.pallas import tpu as pltpu


def _round_up(x, m):
    return ((x + m - 1) // m) * m


# ---------------------------------------------------------------------------
# Kernels (one batch tile per grid step; weights VMEM-resident across steps)
# ---------------------------------------------------------------------------
def _fused_mlp_blockdiag_kernel(x_ref, w1_ref, b1_ref, w2_ref, b2_ref,
                                w3_ref, b3_ref, out_ref):
    """Layer 2 = diag(W2, VW2) as one (2Hp, 2Hp) dot. Used when 2Hp <= 128."""
    # In-kernel f32->bf16 cast of the activations (hidden under the matmuls).
    x = x_ref[...].astype(w1_ref.dtype)
    # Layer 1: fused policy||value -> (TB, 2Hp). MXU f32 accumulation,
    # bias-add / tanh stay in f32 (v5e has no bf16 VPU/EUP).
    h1 = jnp.tanh(jnp.dot(x, w1_ref[...],
                          preferred_element_type=jnp.float32) + b1_ref[...])
    # Layer 2: block-diagonal keeps the two branches independent.
    h2 = jnp.tanh(jnp.dot(h1.astype(w2_ref.dtype), w2_ref[...],
                          preferred_element_type=jnp.float32) + b2_ref[...])
    # Stacked heads -> lane-dense 128-wide slab; bf16 store halves HBM writeback.
    out = jnp.dot(h2.astype(w3_ref.dtype), w3_ref[...],
                  preferred_element_type=jnp.float32) + b3_ref[...]
    out_ref[...] = out.astype(out_ref.dtype)


def _fused_mlp_split_kernel(x_ref, w1_ref, b1_ref, w2_ref, b2_ref,
                            w3_ref, b3_ref, out_ref):
    """Layers 2/3 as two dense per-branch dots. Used when Hp >= 128
    (avoids spending half the layer-2 MXU passes on zeros)."""
    hp = w2_ref.shape[-1]                       # static at trace time
    x = x_ref[...].astype(w1_ref.dtype)
    h1 = jnp.tanh(jnp.dot(x, w1_ref[...],
                          preferred_element_type=jnp.float32) + b1_ref[...])
    h1 = h1.astype(w2_ref.dtype)
    # Policy / value branches (hp is a multiple of 128 -> lane-aligned slices).
    h2p = jnp.tanh(jnp.dot(h1[:, :hp], w2_ref[0],
                           preferred_element_type=jnp.float32) + b2_ref[:, :hp])
    h2v = jnp.tanh(jnp.dot(h1[:, hp:], w2_ref[1],
                           preferred_element_type=jnp.float32) + b2_ref[:, hp:])
    out = (jnp.dot(h2p.astype(w3_ref.dtype), w3_ref[0],
                   preferred_element_type=jnp.float32)
           + jnp.dot(h2v.astype(w3_ref.dtype), w3_ref[1],
                     preferred_element_type=jnp.float32)
           + b3_ref[...])
    out_ref[...] = out.astype(out_ref.dtype)


# ---------------------------------------------------------------------------
# Parameter packing (trace-time, done once in the wrapper — not in the kernel)
# ---------------------------------------------------------------------------
def pack_params(p, *, compute_dtype=jnp.bfloat16):
    """Fuse policy/value branch weights into 3 matmul operands + 3 f32 biases.

    Per-branch hidden width is padded to Hp so that every intermediate is
    lane-dense; the padded units are exactly zero through tanh (zero weight
    columns/rows + zero bias) and contribute nothing to the heads.
    """
    D = p["w1"].shape[0]
    H = p["w2"].shape[0]
    num_outputs = p["w3"].shape[1]
    out_pad = _round_up(num_outputs + 1, 128)   # logits + value, lane-padded

    if H <= 64:
        hp, split_l2 = 64, False                # 2Hp = 128: one block-diag pass
    else:
        hp, split_l2 = _round_up(H, 128), True  # dense per-branch dots

    def pad_c(a, n):                            # pad columns (last dim) to n
        return jnp.pad(a, ((0, 0), (0, n - a.shape[1])))

    def pad_rc(a, r, c):                        # pad rows and columns
        return jnp.pad(a, ((0, r - a.shape[0]), (0, c - a.shape[1])))

    w1 = jnp.concatenate([pad_c(p["w1"], hp), pad_c(p["vw1"], hp)], axis=1)   # (D, 2Hp)
    b1 = jnp.concatenate([pad_c(p["b1"], hp), pad_c(p["vb1"], hp)], axis=1)   # (1, 2Hp)

    w2p = pad_rc(p["w2"], hp, hp)                                             # (Hp, Hp)
    vw2p = pad_rc(p["vw2"], hp, hp)
    b2 = jnp.concatenate([pad_c(p["b2"], hp), pad_c(p["vb2"], hp)], axis=1)   # (1, 2Hp)

    w3p = jnp.zeros((hp, out_pad), jnp.float32).at[:H, :num_outputs].set(p["w3"])
    vw3p = jnp.zeros((hp, out_pad), jnp.float32).at[:H, num_outputs].set(p["vw3"][:, 0])
    b3 = jnp.zeros((1, out_pad), jnp.float32)
    b3 = b3.at[:, :num_outputs].set(p["b3"][0])
    b3 = b3.at[:, num_outputs].set(p["vb3"][0, 0])   # value head lives in column num_outputs

    if split_l2:
        w2 = jnp.stack([w2p, vw2p], axis=0)          # (2, Hp, Hp)
        w3 = jnp.stack([w3p, vw3p], axis=0)          # (2, Hp, out_pad)
    else:
        z = jnp.zeros((hp, hp), jnp.float32)
        w2 = jnp.block([[w2p, z], [z, vw2p]])        # (2Hp, 2Hp)
        w3 = jnp.concatenate([w3p, vw3p], axis=0)    # (2Hp, out_pad)

    return {
        "w1": w1.astype(compute_dtype), "b1": b1.astype(jnp.float32),
        "w2": w2.astype(compute_dtype), "b2": b2.astype(jnp.float32),
        "w3": w3.astype(compute_dtype), "b3": b3.astype(jnp.float32),
    }


# ---------------------------------------------------------------------------
# Wrapper
# ---------------------------------------------------------------------------
def custom_fc_forward(x, packed, num_outputs, *, tb=1024):
    """Runs the CustomFC forward pass. Returns (fc_out, value_flat) in f32."""
    B, D = x.shape
    split_l2 = packed["w2"].ndim == 3
    H2 = packed["w1"].shape[1]              # 2 * Hp
    Hp = H2 // 2
    OUT_PAD = packed["b3"].shape[1]         # lane-padded head width (>= num_outputs + 1)
    out_dtype = packed["w1"].dtype          # bf16 output slab (cast back in wrapper)

    # input_dict['obs'].float(); keep f32 in HBM — bf16 cast happens in-kernel.
    xf = x.astype(jnp.float32)

    # Batch tile: multiple of 16 (bf16 sublane packing), capped at tb, and never
    # a single tile for non-trivial B so v7x can shard across both TensorCores.
    TB = max(16, min(tb, _round_up((B + 1) // 2, 16)))
    Bp = pl.cdiv(B, TB) * TB
    if Bp != B:
        # Padded rows compute tanh(bias) garbage; they are sliced off below and
        # must never be reduced over.
        xf = jnp.pad(xf, ((0, Bp - B), (0, 0)))

    itemsize = lambda a: a.size * a.dtype.itemsize
    l1_flops = 2 * Bp * D * H2
    l2_flops = 2 * Bp * (H2 * Hp if split_l2 else H2 * H2)
    l3_flops = 2 * Bp * H2 * OUT_PAD
    cost = pl.CostEstimate(
        flops=l1_flops + l2_flops + l3_flops,
        transcendentals=2 * Bp * H2,
        bytes_accessed=(Bp * D * 4
                        + sum(itemsize(packed[k])
                              for k in ("w1", "b1", "w2", "b2", "w3", "b3"))
                        + Bp * OUT_PAD * jnp.dtype(out_dtype).itemsize),
    )

    def resident(arr):
        # Weights/biases: same (only) block every step -> VMEM-resident;
        # single-buffered (no point double-buffering a constant block).
        zeros = (0,) * arr.ndim
        return pl.BlockSpec(arr.shape, lambda i, z=zeros: z,
                            pipeline_mode=pl.Buffered(1))

    kernel = _fused_mlp_split_kernel if split_l2 else _fused_mlp_blockdiag_kernel

    out = pl.pallas_call(
        kernel,
        out_shape=jax.ShapeDtypeStruct((Bp, OUT_PAD), out_dtype),
        grid_spec=pltpu.PrefetchScalarGridSpec(
            num_scalar_prefetch=0,
            grid=(Bp // TB,),
            in_specs=[
                pl.BlockSpec((TB, D), lambda i: (i, 0)),   # batch-tiled f32 obs
                resident(packed["w1"]), resident(packed["b1"]),   # fused layer 1
                resident(packed["w2"]), resident(packed["b2"]),   # layer 2 (diag or split)
                resident(packed["w3"]), resident(packed["b3"]),   # stacked heads
            ],
            out_specs=pl.BlockSpec((TB, OUT_PAD), lambda i: (i, 0)),
        ),
        compiler_params=pltpu.CompilerParams(
            # v7x: shard batch tiles across both TensorCores; harmless on v5e/v6e.
            dimension_semantics=("parallel",),
            # Explicit headroom (> v6e 32 MiB default, < v7x 64 MiB physical).
            vmem_limit_bytes=48 * 1024 * 1024,
        ),
        cost_estimate=cost,
    )(xf, packed["w1"], packed["b1"], packed["w2"], packed["b2"],
      packed["w3"], packed["b3"])

    fc_out = out[:B, :num_outputs].astype(jnp.float32)
    value = out[:B, num_outputs].astype(jnp.float32)   # torch.reshape(value_function(), [-1])
    return fc_out, value


# ---------------------------------------------------------------------------
# Synthetic params + pure-JAX reference
# ---------------------------------------------------------------------------
def init_params(key, obs_dim, hidden, num_outputs):
    """Deterministic synthetic parameters (shapes match TorchFC defaults)."""
    keys = jax.random.split(key, 6)

    def lin(k, fan_in, fan_out):
        kw, kb = jax.random.split(k)
        scale = 1.0 / jnp.sqrt(jnp.float32(fan_in))
        w = jax.random.uniform(kw, (fan_in, fan_out), jnp.float32, -scale, scale)
        b = jax.random.uniform(kb, (1, fan_out), jnp.float32, -scale, scale)
        return w, b

    p = {}
    p["w1"], p["b1"] = lin(keys[0], obs_dim, hidden)
    p["w2"], p["b2"] = lin(keys[1], hidden, hidden)
    p["w3"], p["b3"] = lin(keys[2], hidden, num_outputs)
    p["vw1"], p["vb1"] = lin(keys[3], obs_dim, hidden)
    p["vw2"], p["vb2"] = lin(keys[4], hidden, hidden)
    p["vw3"], p["vb3"] = lin(keys[5], hidden, 1)
    return p


def _reference(x, p):
    x = x.astype(jnp.float32)
    h = jnp.tanh(x @ p["w1"] + p["b1"])
    h = jnp.tanh(h @ p["w2"] + p["b2"])
    logits = h @ p["w3"] + p["b3"]
    v = jnp.tanh(x @ p["vw1"] + p["vb1"])
    v = jnp.tanh(v @ p["vw2"] + p["vb2"])
    value = (v @ p["vw3"] + p["vb3"]).reshape(-1)
    return logits, value


# TODO(synk): RLlib plumbing (TorchModelV2 base, input_dict/state/seq_lens) has no
# kernel equivalent; only the TorchFC MLP math (policy + value branches) is implemented.

if __name__ == "__main__":
    key = jax.random.PRNGKey(0)

    def run_case(key, B, obs_dim, hidden, num_outputs):
        k_obs, k_par = jax.random.split(key)
        obs = jax.random.normal(k_obs, (B, obs_dim), jnp.float32)
        params = init_params(k_par, obs_dim, hidden, num_outputs)
        packed = pack_params(params, compute_dtype=jnp.bfloat16)
        fc_out, value = custom_fc_forward(obs, packed, num_outputs)
        jax.block_until_ready((fc_out, value))
        ref_out, ref_val = _reference(obs, params)
        assert fc_out.shape == (B, num_outputs)
        assert value.shape == (B,)
        # bf16 MXU inputs / bf16 output store with f32 accumulation -> small,
        # bounded deviation from the f32 reference.
        assert jnp.allclose(fc_out, ref_out, atol=3e-2, rtol=3e-2)
        assert jnp.allclose(value, ref_val, atol=3e-2, rtol=3e-2)

    k1, k2 = jax.random.split(key)
    # Small demo shapes: block-diagonal layer-2 path (hidden <= 64).
    run_case(k1, B=8, obs_dim=16, hidden=32, num_outputs=4)
    # Larger hidden: per-branch dense-dot path + 2 batch tiles (grid=2).
    run_case(k2, B=48, obs_dim=32, hidden=128, num_outputs=6)

    print("KERNEL_OK")
</pallas_src>

<mosaic_0001>
module attributes {stable_mosaic.version = 11 : i64} {
  func.func @_fused_mlp_blockdiag_kernel(%arg0: i32, %arg1: memref<16x16xf32, #tpu.memory_space<vmem>>, %arg2: memref<16x128xbf16, #tpu.memory_space<vmem>>, %arg3: memref<1x128xf32, #tpu.memory_space<vmem>>, %arg4: memref<128x128xbf16, #tpu.memory_space<vmem>>, %arg5: memref<1x128xf32, #tpu.memory_space<vmem>>, %arg6: memref<128x128xbf16, #tpu.memory_space<vmem>>, %arg7: memref<1x128xf32, #tpu.memory_space<vmem>>, %arg8: memref<16x128xbf16, #tpu.memory_space<vmem>>) attributes {dimension_semantics = [#tpu.dimension_semantics<parallel>], iteration_bounds = array<i64: 1>, scalar_prefetch = 0 : i64, scratch_operands = 0 : i64, tpu.core_type = #tpu.core_type<tc>, window_params = [{transform_indices = @transform_0, window_bounds = array<i64: 16, 16>}, {pipeline_mode = #tpu.pipeline_mode<synchronous>, transform_indices = @transform_1, window_bounds = array<i64: 16, 128>}, {pipeline_mode = #tpu.pipeline_mode<synchronous>, transform_indices = @transform_2, window_bounds = array<i64: 1, 128>}, {pipeline_mode = #tpu.pipeline_mode<synchronous>, transform_indices = @transform_3, window_bounds = array<i64: 128, 128>}, {pipeline_mode = #tpu.pipeline_mode<synchronous>, transform_indices = @transform_4, window_bounds = array<i64: 1, 128>}, {pipeline_mode = #tpu.pipeline_mode<synchronous>, transform_indices = @transform_5, window_bounds = array<i64: 128, 128>}, {pipeline_mode = #tpu.pipeline_mode<synchronous>, transform_indices = @transform_6, window_bounds = array<i64: 1, 128>}, {transform_indices = @transform_7, window_bounds = array<i64: 16, 128>}]} {
    %c0 = arith.constant 0 : index
    %c0_0 = arith.constant 0 : index
    %0 = vector.load %arg1[%c0, %c0_0] : memref<16x16xf32, #tpu.memory_space<vmem>>, vector<16x16xf32>
    %1 = arith.truncf %0 : vector<16x16xf32> to vector<16x16xbf16>
    %c0_1 = arith.constant 0 : index
    %c0_2 = arith.constant 0 : index
    %2 = vector.load %arg2[%c0_1, %c0_2] : memref<16x128xbf16, #tpu.memory_space<vmem>>, vector<16x128xbf16>
    %cst = arith.constant dense<0.000000e+00> : vector<16x128xf32>
    %3 = tpu.matmul %1, %2, %cst {dimension_numbers = #tpu.dot_dimension_numbers<[1], [0], [0], [1], [0, 0, 1, 1], [], []>} : vector<16x16xbf16>, vector<16x128xbf16>, vector<16x128xf32> -> vector<16x128xf32>
    %c0_3 = arith.constant 0 : index
    %c0_4 = arith.constant 0 : index
    %4 = vector.load %arg3[%c0_3, %c0_4] : memref<1x128xf32, #tpu.memory_space<vmem>>, vector<1x128xf32>
    %5 = vector.broadcast %4 : vector<1x128xf32> to vector<16x128xf32>
    %6 = arith.addf %3, %5 : vector<16x128xf32>
    %7 = math.tanh %6 : vector<16x128xf32>
    %8 = arith.truncf %7 : vector<16x128xf32> to vector<16x128xbf16>
    %c0_5 = arith.constant 0 : index
    %c0_6 = arith.constant 0 : index
    %9 = vector.load %arg4[%c0_5, %c0_6] : memref<128x128xbf16, #tpu.memory_space<vmem>>, vector<128x128xbf16>
    %cst_7 = arith.constant dense<0.000000e+00> : vector<16x128xf32>
    %10 = tpu.matmul %8, %9, %cst_7 {dimension_numbers = #tpu.dot_dimension_numbers<[1], [0], [0], [1], [0, 0, 1, 1], [], []>} : vector<16x128xbf16>, vector<128x128xbf16>, vector<16x128xf32> -> vector<16x128xf32>
    %c0_8 = arith.constant 0 : index
    %c0_9 = arith.constant 0 : index
    %11 = vector.load %arg5[%c0_8, %c0_9] : memref<1x128xf32, #tpu.memory_space<vmem>>, vector<1x128xf32>
    %12 = vector.broadcast %11 : vector<1x128xf32> to vector<16x128xf32>
    %13 = arith.addf %10, %12 : vector<16x128xf32>
    %14 = math.tanh %13 : vector<16x128xf32>
    %15 = arith.truncf %14 : vector<16x128xf32> to vector<16x128xbf16>
    %c0_10 = arith.constant 0 : index
    %c0_11 = arith.constant 0 : index
    %16 = vector.load %arg6[%c0_10, %c0_11] : memref<128x128xbf16, #tpu.memory_space<vmem>>, vector<128x128xbf16>
    %cst_12 = arith.constant dense<0.000000e+00> : vector<16x128xf32>
    %17 = tpu.matmul %15, %16, %cst_12 {dimension_numbers = #tpu.dot_dimension_numbers<[1], [0], [0], [1], [0, 0, 1, 1], [], []>} : vector<16x128xbf16>, vector<128x128xbf16>, vector<16x128xf32> -> vector<16x128xf32>
    %c0_13 = arith.constant 0 : index
    %c0_14 = arith.constant 0 : index
    %18 = vector.load %arg7[%c0_13, %c0_14] : memref<1x128xf32, #tpu.memory_space<vmem>>, vector<1x128xf32>
    %19 = vector.broadcast %18 : vector<1x128xf32> to vector<16x128xf32>
    %20 = arith.addf %17, %19 : vector<16x128xf32>
    %21 = arith.truncf %20 : vector<16x128xf32> to vector<16x128xbf16>
    %c0_15 = arith.constant 0 : index
    %c0_16 = arith.constant 0 : index
    %22 = vector.load %arg8[%c0_15, %c0_16] : memref<16x128xbf16, #tpu.memory_space<vmem>>, vector<16x128xbf16>
    tpu.vector_store %arg8[%c0_15, %c0_16], %21 {strides = array<i32>} : memref<16x128xbf16, #tpu.memory_space<vmem>>, vector<16x128xbf16>,
    return
  }
  func.func @transform_0(%arg0: i32) -> (i32, i32) {
    %c0_i32 = arith.constant 0 : i32
    %c0_i32_0 = arith.constant 0 : i32
    return %arg0, %c0_i32 : i32, i32
  }
  func.func @transform_1(%arg0: i32) -> (i32, i32) {
    %c0_i32 = arith.constant 0 : i32
    %c0_i32_0 = arith.constant 0 : i32
    %c0_i32_1 = arith.constant 0 : i32
    return %c0_i32, %c0_i32_0 : i32, i32
  }
  func.func @transform_2(%arg0: i32) -> (i32, i32) {
    %c0_i32 = arith.constant 0 : i32
    %c0_i32_0 = arith.constant 0 : i32
    %c0_i32_1 = arith.constant 0 : i32
    return %c0_i32, %c0_i32_0 : i32, i32
  }
  func.func @transform_3(%arg0: i32) -> (i32, i32) {
    %c0_i32 = arith.constant 0 : i32
    %c0_i32_0 = arith.constant 0 : i32
    %c0_i32_1 = arith.constant 0 : i32
    return %c0_i32, %c0_i32_0 : i32, i32
  }
  func.func @transform_4(%arg0: i32) -> (i32, i32) {
    %c0_i32 = arith.constant 0 : i32
    %c0_i32_0 = arith.constant 0 : i32
    %c0_i32_1 = arith.constant 0 : i32
    return %c0_i32, %c0_i32_0 : i32, i32
  }
  func.func @transform_5(%arg0: i32) -> (i32, i32) {
    %c0_i32 = arith.constant 0 : i32
    %c0_i32_0 = arith.constant 0 : i32
    %c0_i32_1 = arith.constant 0 : i32
    return %c0_i32, %c0_i32_0 : i32, i32
  }
  func.func @transform_6(%arg0: i32) -> (i32, i32) {
    %c0_i32 = arith.constant 0 : i32
    %c0_i32_0 = arith.constant 0 : i32
    %c0_i32_1 = arith.constant 0 : i32
    return %c0_i32, %c0_i32_0 : i32, i32
  }
  func.func @transform_7(%arg0: i32) -> (i32, i32) {
    %c0_i32 = arith.constant 0 : i32
    %c0_i32_0 = arith.constant 0 : i32
    return %arg0, %c0_i32 : i32, i32
  }
}

</mosaic_0001>

<llo_original>
// kernel: tpu_custom_call.1
$region0: #{tpu_custom_call.1}
  #allocation0 [shape = 'u32[]', space=smem, size = 0x4, offset = 0x4, fixed_abs, tag = 'smem constant byte address 0x4 - core index']
  #allocation1 [shape = 'u32[144,128]{1,0:T(1,128)}', space=vmem, size = 0x12000, scoped, tag = 'internal scratch']
  %s0 = inlined_call_operand.hbm [shape: f32[16,16], index: 0, kind: input, shape index: {}]
  %s1 = inlined_call_operand.hbm [shape: bf16[16,128], index: 1, kind: input, shape index: {}]
  %s2 = inlined_call_operand.vmem [shape: f32[1,128], index: 2, kind: input, shape index: {}]
  %s3 = inlined_call_operand.hbm [shape: bf16[128,128], index: 3, kind: input, shape index: {}]
  %s4 = inlined_call_operand.vmem [shape: f32[1,128], index: 4, kind: input, shape index: {}]
  %s5 = inlined_call_operand.hbm [shape: bf16[128,128], index: 5, kind: input, shape index: {}]
  %s6 = inlined_call_operand.vmem [shape: f32[1,128], index: 6, kind: input, shape index: {}]
  %s7 = inlined_call_operand.hbm [shape: bf16[16,128], index: 7, kind: output, shape index: {}]
  %s8 = sld [smem:[#allocation0]]
  $region54: #{tpu_custom_call.1} parent=0
    _
  %s10 = ssub.s32 1, %s8
  %s11 = scalar_select 0, %s10, %s8
  $region1: #{tpu_custom_call.1} parent=0
    #allocation2 [shape = 'u8[8192]{0}', space=vmem, size = 0x2000, scoped, tag = 'input window, operand 0, single buffered']
    #allocation3 [shape = 's32[1]{0}', space=sflag, size = 0x4, scoped, tag = 'scoped memory for tpu_custom_call.1']
    #allocation4 [shape = 's32[1]{0}', space=sflag, size = 0x4, scoped, tag = 'scoped memory for tpu_custom_call.1']
    #allocation5 [shape = 'u8[4096]{0}', space=vmem, size = 0x1000, scoped, tag = 'input window, operand 1, single buffered']
    #allocation6 [shape = 's32[1]{0}', space=sflag, size = 0x4, scoped, tag = 'scoped memory for tpu_custom_call.1']
    #allocation7 [shape = 'u8[32768]{0}', space=vmem, size = 0x8000, scoped, tag = 'input window, operand 3, single buffered']
    #allocation8 [shape = 'u8[32768]{0}', space=vmem, size = 0x8000, scoped, tag = 'input window, operand 5, single buffered']
    #allocation9 [shape = 's32[1]{0}', space=sflag, size = 0x4, scoped, tag = 'scoped memory for tpu_custom_call.1']
    #allocation10 [shape = 'u8[4096]{0}', space=vmem, size = 0x1000, scoped, tag = 'output window, operand 0, single buffered']
    %12 = vsyncpa [#allocation3], 0
    %13 = vsyncpa [#allocation6], 0
    %14 = vsyncpa [#allocation9], 0
    %15 = vsyncpa [#allocation4], 0
    // Predicated region
    $region2: #{tpu_custom_call.1} parent=1 // pred_check
      _
    $region3: #{tpu_custom_call.1} parent=1 // pred_check_branch
      %17 = sbr.rel (0) target = $region5
    $region4: #{tpu_custom_call.1} parent=1 // pred_region
      %s19 = ssub.s32 256, 256
      %20 = vsyncadd [#allocation3], %s19
      %s21 = sshll.u32 [#allocation2], 4
      %s22 = int_to_ptr.vmem [resolvable:$true] %s21
      %27 = dma.hbm_to_vmem [thread:$0]  %s0, 256, %s22, [#allocation3], 128, 128, 8
    $region5: #{tpu_custom_call.1} parent=1 // pred_fallthru
      _
    // Predicated region
    $region6: #{tpu_custom_call.1} parent=1 // pred_check
      _
    $region7: #{tpu_custom_call.1} parent=1 // pred_check_branch
      %29 = sbr.rel (0) target = $region9
    $region8: #{tpu_custom_call.1} parent=1 // pred_region
      %s31 = ssub.s32 128, 128
      %32 = vsyncadd [#allocation6], %s31
      %s33 = sshll.u32 [#allocation5], 4
      %s34 = int_to_ptr.vmem [resolvable:$true] %s33
      %39 = dma.hbm_to_vmem [thread:$0]  %s1, 128, %s34, [#allocation6], 64, 64, 4
    $region9: #{tpu_custom_call.1} parent=1 // pred_fallthru
      _
    // Predicated region
    $region10: #{tpu_custom_call.1} parent=1 // pred_check
      _
    $region11: #{tpu_custom_call.1} parent=1 // pred_check_branch
      %41 = sbr.rel (0) target = $region13
    $region12: #{tpu_custom_call.1} parent=1 // pred_region
      _
    $region13: #{tpu_custom_call.1} parent=1 // pred_fallthru
      _
    // Predicated region
    $region14: #{tpu_custom_call.1} parent=1 // pred_check
      _
    $region15: #{tpu_custom_call.1} parent=1 // pred_check_branch
      %43 = sbr.rel (0) target = $region17
    $region16: #{tpu_custom_call.1} parent=1 // pred_region
      %s45 = ssub.s32 1024, 1024
      %46 = vsyncadd [#allocation6], %s45
      %s47 = sshll.u32 [#allocation7], 4
      %s48 = int_to_ptr.vmem [resolvable:$true] %s47
      %53 = dma.hbm_to_vmem [thread:$0]  %s3, 1024, %s48, [#allocation6], 64, 64, 4
    $region17: #{tpu_custom_call.1} parent=1 // pred_fallthru
      _
    // Predicated region
    $region18: #{tpu_custom_call.1} parent=1 // pred_check
      _
    $region19: #{tpu_custom_call.1} parent=1 // pred_check_branch
      %55 = sbr.rel (0) target = $region21
    $region20: #{tpu_custom_call.1} parent=1 // pred_region
      _
    $region21: #{tpu_custom_call.1} parent=1 // pred_fallthru
      _
    // Predicated region
    $region22: #{tpu_custom_call.1} parent=1 // pred_check
      _
    $region23: #{tpu_custom_call.1} parent=1 // pred_check_branch
      %57 = sbr.rel (0) target = $region25
    $region24: #{tpu_custom_call.1} parent=1 // pred_region
      %s59 = ssub.s32 1024, 1024
      %60 = vsyncadd [#allocation9], %s59
      %s61 = sshll.u32 [#allocation8], 4
      %s62 = int_to_ptr.vmem [resolvable:$true] %s61
      %67 = dma.hbm_to_vmem [thread:$0]  %s5, 1024, %s62, [#allocation9], 64, 64, 4
    $region25: #{tpu_custom_call.1} parent=1 // pred_fallthru
      _
    // Predicated region
    $region26: #{tpu_custom_call.1} parent=1 // pred_check
      _
    $region27: #{tpu_custom_call.1} parent=1 // pred_check_branch
      %69 = sbr.rel (0) target = $region29
    $region28: #{tpu_custom_call.1} parent=1 // pred_region
      _
    $region29: #{tpu_custom_call.1} parent=1 // pred_fallthru
      _
    // Predicated region
    $region30: #{tpu_custom_call.1} parent=1 // pred_check
      _
    $region31: #{tpu_custom_call.1} parent=1 // pred_check_branch
      %71 = sbr.rel (0) target = $region33
    $region32: #{tpu_custom_call.1} parent=1 // pred_region
      %72 = dma.done [#allocation3], 256
    $region33: #{tpu_custom_call.1} parent=1 // pred_fallthru
      _
    // Predicated region
    $region34: #{tpu_custom_call.1} parent=1 // pred_check
      _
    $region35: #{tpu_custom_call.1} parent=1 // pred_check_branch
      %74 = sbr.rel (0) target = $region37
    $region36: #{tpu_custom_call.1} parent=1 // pred_region
      %75 = dma.done [#allocation6], 128
    $region37: #{tpu_custom_call.1} parent=1 // pred_fallthru
      _
    // Predicated region
    $region38: #{tpu_custom_call.1} parent=1 // pred_check
      _
    $region39: #{tpu_custom_call.1} parent=1 // pred_check_branch
      %77 = sbr.rel (0) target = $region41
    $region40: #{tpu_custom_call.1} parent=1 // pred_region
      %78 = dma.done [#allocation6], 1024
    $region41: #{tpu_custom_call.1} parent=1 // pred_fallthru
      _
    // Predicated region
    $region42: #{tpu_custom_call.1} parent=1 // pred_check
      _
    $region43: #{tpu_custom_call.1} parent=1 // pred_check_branch
      %80 = sbr.rel (0) target = $region45
    $region44: #{tpu_custom_call.1} parent=1 // pred_region
      %81 = dma.done [#allocation9], 1024
    $region45: #{tpu_custom_call.1} parent=1 // pred_fallthru
      _
    %v83 = vld [vmem:[#allocation2] sm:$0xff]
    %v84 = vld [vmem:[#allocation2 + $0x8] sm:$0xff]
    %v85 = vpack.c.bf16 %v84, %v83
    %v86 = vld [vmem:[#allocation5] sm:$0xf]
    %v87 = vld [vmem:[#allocation5 + $0x4] sm:$0xf]
    %v88 = vld [vmem:[%s2] sm:$0x1]
    %v90 = vlaneseq
    %v91 = vshrl.u32 %v90, 7
    %v92 = vsub.s32 0, %v91
    %v93 = vrot.slane %v88, %v92
    %v97 = vunpack.c.l.b16 %v86
    %v98 = vunpack.c.l.b16 %v87
    %v99 = vpack.c.b16 %v98, %v97
    %vm101 = vcmask 130048
    %v103 = vsel %vm101, %v85, 0
    %105 = vmatprep.subr.bf16.mxu0 0
    %106 = vmatpush1.bf16.msra.mxu0 0
    %107 = vmatprep.subr.bf16.mxu0 0
    %108 = vmatpush1.bf16.msra.mxu0 0
    %109 = vmatprep.subr.bf16.mxu0 0
    %110 = vmatpush1.bf16.msra.mxu0 0
    %111 = vmatprep.subr.bf16.mxu0 0
    %112 = vmatpush1.bf16.msra.mxu0 0
    %113 = vmatprep.subr.bf16.mxu0 0
    %114 = vmatpush1.bf16.msra.mxu0 0
    %115 = vmatprep.subr.bf16.mxu0 0
    %116 = vmatpush1.bf16.msra.mxu0 0
    %117 = vmatprep.subr.bf16.mxu0 0
    %118 = vmatpush1.bf16.msra.mxu0 0
    %119 = vmatprep.subr.bf16.mxu0 0
    %120 = vmatpush1.bf16.msra.mxu0 %v99
    %121 = vmatprep.subr.bf16.mxu0 0
    %122 = vmatpush2.bf16.msra.mxu0 0
    %123 = vmatprep.subr.bf16.mxu0 0
    %124 = vmatpush2.bf16.msra.mxu0 0
    %125 = vmatprep.subr.bf16.mxu0 0
    %126 = vmatpush2.bf16.msra.mxu0 0
    %127 = vmatprep.subr.bf16.mxu0 0
    %128 = vmatpush2.bf16.msra.mxu0 0
    %129 = vmatprep.subr.bf16.mxu0 0
    %130 = vmatpush2.bf16.msra.mxu0 0
    %131 = vmatprep.subr.bf16.mxu0 0
    %132 = vmatpush2.bf16.msra.mxu0 0
    %133 = vmatprep.subr.bf16.mxu0 0
    %134 = vmatpush2.bf16.msra.mxu0 0
    %135 = vmatprep.subr.bf16.mxu0 0
    %136 = vmatpush2.bf16.msra.mxu0 0
    %137 = vmatprep.mubr.bf16.mxu0 0
    %138 = vmatmul.mubr.bf16.gmra.mxu0 %v103
    %v139 = vpop.f32.mrf.mxu0
    %v140 = vadd.f32 %v93, %v139
    %v141 = vpop.f32.mrf.mxu0
    %v142 = vpop.f32.mrf.mxu0
    %v143 = vadd.f32 %v93, %v142
    %v144 = vpop.f32.mrf.mxu0
    %145 = vdwg.mxu0
    %v146 = vtanh.pop %v140
    %v147 = vtanh.pop %v143
    %v148 = vpack.c.bf16 %v147, %v146
    %v149 = vld [vmem:[#allocation7] sm:$0xf]
    %v150 = vld [vmem:[#allocation7 + $0x4] sm:$0xf]
    %v151 = vld [vmem:[#allocation7 + $0x8] sm:$0xf]
    %v152 = vld [vmem:[#allocation7 + $0xc] sm:$0xf]
    %v153 = vld [vmem:[#allocation7 + $0x10] sm:$0xf]
    %v154 = vld [vmem:[#allocation7 + $0x14] sm:$0xf]
    %v155 = vld [vmem:[#allocation7 + $0x18] sm:$0xf]
    %v156 = vld [vmem:[#allocation7 + $0x1c] sm:$0xf]
    %v157 = vld [vmem:[#allocation7 + $0x20] sm:$0xf]
    %v158 = vld [vmem:[#allocation7 + $0x24] sm:$0xf]
    %v159 = vld [vmem:[#allocation7 + $0x28] sm:$0xf]
    %v160 = vld [vmem:[#allocation7 + $0x2c] sm:$0xf]
    %v161 = vld [vmem:[#allocation7 + $0x30] sm:$0xf]
    %v162 = vld [vmem:[#allocation7 + $0x34] sm:$0xf]
    %v163 = vld [vmem:[#allocation7 + $0x38] sm:$0xf]
    %v164 = vld [vmem:[#allocation7 + $0x3c] sm:$0xf]
    %v165 = vld [vmem:[%s4] sm:$0x1]
    %v167 = vlaneseq
    %v168 = vshrl.u32 %v167, 7
    %v169 = vsub.s32 0, %v168
    %v170 = vrot.slane %v165, %v169
    %v188 = vunpack.c.l.b16 %v149
    %v189 = vunpack.c.l.b16 %v150
    %v190 = vunpack.c.l.b16 %v151
    %v191 = vunpack.c.l.b16 %v152
    %v192 = vunpack.c.l.b16 %v153
    %v193 = vunpack.c.l.b16 %v154
    %v194 = vunpack.c.l.b16 %v155
    %v195 = vunpack.c.l.b16 %v156
    %v196 = vunpack.c.l.b16 %v157
    %v197 = vunpack.c.l.b16 %v158
    %v198 = vunpack.c.l.b16 %v159
    %v199 = vunpack.c.l.b16 %v160
    %v200 = vunpack.c.l.b16 %v161
    %v201 = vunpack.c.l.b16 %v162
    %v202 = vunpack.c.l.b16 %v163
    %v203 = vunpack.c.l.b16 %v164
    %v204 = vpack.c.b16 %v189, %v188
    %v205 = vpack.c.b16 %v191, %v190
    %v206 = vpack.c.b16 %v193, %v192
    %v207 = vpack.c.b16 %v195, %v194
    %v208 = vpack.c.b16 %v197, %v196
    %v209 = vpack.c.b16 %v199, %v198
    %v210 = vpack.c.b16 %v201, %v200
    %v211 = vpack.c.b16 %v203, %v202
    %220 = vmatprep.subr.bf16.mxu0 0
    %221 = vmatpush1.bf16.msra.mxu0 %v211
    %222 = vmatprep.subr.bf16.mxu0 0
    %223 = vmatpush1.bf16.msra.mxu0 %v210
    %224 = vmatprep.subr.bf16.mxu0 0
    %225 = vmatpush1.bf16.msra.mxu0 %v209
    %226 = vmatprep.subr.bf16.mxu0 0
    %227 = vmatpush1.bf16.msra.mxu0 %v208
    %228 = vmatprep.subr.bf16.mxu0 0
    %229 = vmatpush1.bf16.msra.mxu0 %v207
    %230 = vmatprep.subr.bf16.mxu0 0
    %231 = vmatpush1.bf16.msra.mxu0 %v206
    %232 = vmatprep.subr.bf16.mxu0 0
    %233 = vmatpush1.bf16.msra.mxu0 %v205
    %234 = vmatprep.subr.bf16.mxu0 0
    %235 = vmatpush1.bf16.msra.mxu0 %v204
    %236 = vmatprep.subr.bf16.mxu0 0
    %237 = vmatpush2.bf16.msra.mxu0 0
    %238 = vmatprep.subr.bf16.mxu0 0
    %239 = vmatpush2.bf16.msra.mxu0 0
    %240 = vmatprep.subr.bf16.mxu0 0
    %241 = vmatpush2.bf16.msra.mxu0 0
    %242 = vmatprep.subr.bf16.mxu0 0
    %243 = vmatpush2.bf16.msra.mxu0 0
    %244 = vmatprep.subr.bf16.mxu0 0
    %245 = vmatpush2.bf16.msra.mxu0 0
    %246 = vmatprep.subr.bf16.mxu0 0
    %247 = vmatpush2.bf16.msra.mxu0 0
    %248 = vmatprep.subr.bf16.mxu0 0
    %249 = vmatpush2.bf16.msra.mxu0 0
    %250 = vmatprep.subr.bf16.mxu0 0
    %251 = vmatpush2.bf16.msra.mxu0 0
    %252 = vmatprep.mubr.bf16.mxu0 0
    %253 = vmatmul.mubr.bf16.gmra.mxu0 %v148
    %v254 = vpop.f32.mrf.mxu0
    %v255 = vadd.f32 %v170, %v254
    %v256 = vpop.f32.mrf.mxu0
    %v257 = vpop.f32.mrf.mxu0
    %v258 = vadd.f32 %v170, %v257
    %v259 = vpop.f32.mrf.mxu0
    %260 = vdwg.mxu0
    %v261 = vtanh.pop %v255
    %v262 = vtanh.pop %v258
    %v263 = vpack.c.bf16 %v262, %v261
    %v264 = vld [vmem:[#allocation8] sm:$0xf]
    %v265 = vld [vmem:[#allocation8 + $0x4] sm:$0xf]
    %v266 = vld [vmem:[#allocation8 + $0x8] sm:$0xf]
    %v267 = vld [vmem:[#allocation8 + $0xc] sm:$0xf]
    %v268 = vld [vmem:[#allocation8 + $0x10] sm:$0xf]
    %v269 = vld [vmem:[#allocation8 + $0x14] sm:$0xf]
    %v270 = vld [vmem:[#allocation8 + $0x18] sm:$0xf]
    %v271 = vld [vmem:[#allocation8 + $0x1c] sm:$0xf]
    %v272 = vld [vmem:[#allocation8 + $0x20] sm:$0xf]
    %v273 = vld [vmem:[#allocation8 + $0x24] sm:$0xf]
    %v274 = vld [vmem:[#allocation8 + $0x28] sm:$0xf]
    %v275 = vld [vmem:[#allocation8 + $0x2c] sm:$0xf]
    %v276 = vld [vmem:[#allocation8 + $0x30] sm:$0xf]
    %v277 = vld [vmem:[#allocation8 + $0x34] sm:$0xf]
    %v278 = vld [vmem:[#allocation8 + $0x38] sm:$0xf]
    %v279 = vld [vmem:[#allocation8 + $0x3c] sm:$0xf]
    %v280 = vld [vmem:[%s6] sm:$0x1]
    %v282 = vlaneseq
    %v283 = vshrl.u32 %v282, 7
    %v284 = vsub.s32 0, %v283
    %v285 = vrot.slane %v280, %v284
    %v303 = vunpack.c.l.b16 %v264
    %v304 = vunpack.c.l.b16 %v265
    %v305 = vunpack.c.l.b16 %v266
    %v306 = vunpack.c.l.b16 %v267
    %v307 = vunpack.c.l.b16 %v268
    %v308 = vunpack.c.l.b16 %v269
    %v309 = vunpack.c.l.b16 %v270
    %v310 = vunpack.c.l.b16 %v271
    %v311 = vunpack.c.l.b16 %v272
    %v312 = vunpack.c.l.b16 %v273
    %v313 = vunpack.c.l.b16 %v274
    %v314 = vunpack.c.l.b16 %v275
    %v315 = vunpack.c.l.b16 %v276
    %v316 = vunpack.c.l.b16 %v277
    %v317 = vunpack.c.l.b16 %v278
    %v318 = vunpack.c.l.b16 %v279
    %v319 = vpack.c.b16 %v304, %v303
    %v320 = vpack.c.b16 %v306, %v305
    %v321 = vpack.c.b16 %v308, %v307
    %v322 = vpack.c.b16 %v310, %v309
    %v323 = vpack.c.b16 %v312, %v311
    %v324 = vpack.c.b16 %v314, %v313
    %v325 = vpack.c.b16 %v316, %v315
    %v326 = vpack.c.b16 %v318, %v317
    %335 = vmatprep.subr.bf16.mxu0 0
    %336 = vmatpush1.bf16.msra.mxu0 %v326
    %337 = vmatprep.subr.bf16.mxu0 0
    %338 = vmatpush1.bf16.msra.mxu0 %v325
    %339 = vmatprep.subr.bf16.mxu0 0
    %340 = vmatpush1.bf16.msra.mxu0 %v324
    %341 = vmatprep.subr.bf16.mxu0 0
    %342 = vmatpush1.bf16.msra.mxu0 %v323
    %343 = vmatprep.subr.bf16.mxu0 0
    %344 = vmatpush1.bf16.msra.mxu0 %v322
    %345 = vmatprep.subr.bf16.mxu0 0
    %346 = vmatpush1.bf16.msra.mxu0 %v321
    %347 = vmatprep.subr.bf16.mxu0 0
    %348 = vmatpush1.bf16.msra.mxu0 %v320
    %349 = vmatprep.subr.bf16.mxu0 0
    %350 = vmatpush1.bf16.msra.mxu0 %v319
    %351 = vmatprep.subr.bf16.mxu0 0
    %352 = vmatpush2.bf16.msra.mxu0 0
    %353 = vmatprep.subr.bf16.mxu0 0
    %354 = vmatpush2.bf16.msra.mxu0 0
    %355 = vmatprep.subr.bf16.mxu0 0
    %356 = vmatpush2.bf16.msra.mxu0 0
    %357 = vmatprep.subr.bf16.mxu0 0
    %358 = vmatpush2.bf16.msra.mxu0 0
    %359 = vmatprep.subr.bf16.mxu0 0
    %360 = vmatpush2.bf16.msra.mxu0 0
    %361 = vmatprep.subr.bf16.mxu0 0
    %362 = vmatpush2.bf16.msra.mxu0 0
    %363 = vmatprep.subr.bf16.mxu0 0
    %364 = vmatpush2.bf16.msra.mxu0 0
    %365 = vmatprep.subr.bf16.mxu0 0
    %366 = vmatpush2.bf16.msra.mxu0 0
    %367 = vmatprep.mubr.bf16.mxu0 0
    %368 = vmatmul.mubr.bf16.gmra.mxu0 %v263
    %v369 = vpop.f32.mrf.mxu0
    %v370 = vadd.f32 %v285, %v369
    %v371 = vpop.f32.mrf.mxu0
    %v372 = vpop.f32.mrf.mxu0
    %v373 = vadd.f32 %v285, %v372
    %v374 = vpop.f32.mrf.mxu0
    %375 = vdwg.mxu0
    %v376 = vpack.c.bf16 %v373, %v370
    %v378 = vunpack.c.l.b16 %v376
    %v379 = vunpack.c.h.b16 %v376
    %v380 = vpack.c.b16 %v378, %v378
    %v381 = vpack.c.b16 %v379, %v379
    %384 = vst [vmem:[#allocation10] sm:$0xf] %v380
    %385 = vst [vmem:[#allocation10 + $0x4] sm:$0xf] %v381
    // Predicated region
    $region46: #{tpu_custom_call.1} parent=1 // pred_check
      _
    $region47: #{tpu_custom_call.1} parent=1 // pred_check_branch
      %387 = sbr.rel (0) target = $region49
    $region48: #{tpu_custom_call.1} parent=1 // pred_region
      %s389 = ssub.s32 128, 128
      %390 = vsyncadd [#allocation4], %s389
      %s391 = sshll.u32 [#allocation10], 4
      %s392 = int_to_ptr.vmem [resolvable:$true] %s391
      %397 = dma.vmem_to_hbm [thread:$0]  %s392, 128, %s7, [#allocation4], 64, 64, 4
    $region49: #{tpu_custom_call.1} parent=1 // pred_fallthru
      _
    // Predicated region
    $region50: #{tpu_custom_call.1} parent=1 // pred_check
      _
    $region51: #{tpu_custom_call.1} parent=1 // pred_check_branch
      %399 = sbr.rel (0) target = $region53
    $region52: #{tpu_custom_call.1} parent=1 // pred_region
      %400 = dma.done [#allocation4], 128
    $region53: #{tpu_custom_call.1} parent=1 // pred_fallthru
      _
    %401 = vsyncpa [#allocation3], 1
    %402 = vsyncpa [#allocation6], 1
    %403 = vsyncpa [#allocation9], 1
    %404 = vsyncpa [#allocation4], 1

</llo_original>
